<compile_context>
chip_gen: v7x
topology: tpu7x:2x2x1
jax: 0.10.0
libtpu: 0.0.40
codegen_flags: <defaults>
</compile_context>

<pallas_src>
import functools

import jax
import jax.numpy as jnp
from jax import lax
from jax.experimental import pallas as pl
from jax.experimental.pallas import tpu as pltpu

_LN_EPS = 1e-5


# ----------------------------------------------------------------------------
# small helpers
# ----------------------------------------------------------------------------
@functools.lru_cache(maxsize=None)
def _vmem_limit_bytes():
    """Generation-aware VMEM limit: ~3/4 of physical per-core VMEM, capped at
    100 MiB (=> ~96 MiB on v5e/v6e's 128 MiB, ~48 MiB on v7x's 64 MiB)."""
    try:
        info = pltpu.get_tpu_info()
        cap = getattr(info, "vmem_capacity_bytes", None)
        if not cap:
            return None
        return int(min((cap * 3) // 4, 100 * 1024 * 1024))
    except Exception:  # non-TPU / older runtimes: fall back to compiler default
        return None


def _compiler_params(dimension_semantics):
    return pltpu.CompilerParams(dimension_semantics=dimension_semantics,
                                vmem_limit_bytes=_vmem_limit_bytes())


def _pick_row_tile(n, max_tile):
    """Row (sublane-axis) tile: full extent if small, otherwise a large
    multiple-of-16 tile.  Grids use pl.cdiv, so the last tile may be ragged —
    no fallback to tiny tiles when n is not divisible."""
    if n <= max_tile:
        return n
    cands = [c for c in (max_tile, (max_tile * 3) // 4, max_tile // 2,
                         max_tile // 4) if c >= 16]
    for c in cands:
        if n % c == 0:
            return c
    # none divides: minimize padded waste, prefer larger tiles on ties
    return min(cands, key=lambda c: (pl.cdiv(n, c) * c - n, -c))


def _residual_layernorm(resid, delta, gamma, beta, eps):
    """LayerNorm(resid + delta) over the last dim (PyTorch: biased variance)."""
    z = resid + delta
    mean = jnp.mean(z, axis=-1, keepdims=True)
    c = z - mean
    var = jnp.mean(c * c, axis=-1, keepdims=True)
    return (c * lax.rsqrt(var + eps)) * gamma + beta


# ----------------------------------------------------------------------------
# kernel 1: positional-embed add + input projection  (x + pos) @ W + b
# ----------------------------------------------------------------------------
def _make_proj_kernel(n_out, d_model, compute_dtype):
    def kernel(x_ref, pos_ref, w_ref, b_ref, *o_refs):
        x = (x_ref[0] + pos_ref[0]).astype(compute_dtype)          # (Tl, E)
        y = jnp.dot(x, w_ref[...],
                    preferred_element_type=jnp.float32) + b_ref[...]   # (Tl, n*E) f32
        for i in range(n_out):
            o_refs[i][0] = y[:, i * d_model:(i + 1) * d_model].astype(o_refs[i].dtype)
    return kernel


def _proj_block(x, pos, w_t, b, *, n_out, compute_dtype, max_tile=512):
    """(x + pos) @ w_t + b with w_t: (E, n_out*E).  One wide MXU matmul per
    row-tile; the result is split into n_out separate (B, L, E) outputs so
    downstream attention BlockSpecs keep a full, lane-dense last dim."""
    B, L, E = x.shape
    assert w_t.shape == (E, n_out * E)
    Tl = _pick_row_tile(L, max_tile)
    grid = (B, pl.cdiv(L, Tl))

    act_spec = pl.BlockSpec((1, Tl, E), lambda bi, t: (bi, t, 0))
    out_specs = [pl.BlockSpec((1, Tl, E), lambda bi, t: (bi, t, 0))
                 for _ in range(n_out)]
    out_shape = tuple(jax.ShapeDtypeStruct((B, L, E), compute_dtype)
                      for _ in range(n_out))
    if n_out == 1:
        out_specs = out_specs[0]
        out_shape = out_shape[0]

    # TODO(synk): mark grid-invariant weight/bias blocks with
    # pipeline_mode=pl.Buffered(1) to drop their 2x double-buffer VMEM.
    outs = pl.pallas_call(
        _make_proj_kernel(n_out, E, compute_dtype),
        out_shape=out_shape,
        grid=grid,
        in_specs=[
            act_spec, act_spec,
            pl.BlockSpec((E, n_out * E), lambda bi, t: (0, 0)),
            pl.BlockSpec((1, n_out * E), lambda bi, t: (0, 0)),
        ],
        out_specs=out_specs,
        compiler_params=_compiler_params(("parallel", "parallel")),
    )(x, pos, w_t, b)
    return (outs,) if n_out == 1 else tuple(outs)


# ----------------------------------------------------------------------------
# kernel 2: multi-head attention core + output projection + residual + LN
# ----------------------------------------------------------------------------
def _make_attn_ln_kernel(num_heads, head_dim, eps, compute_dtype):
    def kernel(resid_ref, qp_ref, kp_ref, vp_ref, wo_ref, bo_ref,
               g_ref, beta_ref, o_ref, head_slab):
        q_p = qp_ref[0]                      # (Tq, E) compute_dtype, pre-scaled
        k_p = kp_ref[0]                      # (Lk, E) compute_dtype
        v_p = vp_ref[0]                      # (Lk, E) compute_dtype
        for h in range(num_heads):
            sl = slice(h * head_dim, (h + 1) * head_dim)
            # scores = q_h @ k_h^T (contract last dims, no explicit transpose)
            s = lax.dot_general(q_p[:, sl], k_p[:, sl],
                                (((1,), (1,)), ((), ())),
                                preferred_element_type=jnp.float32)   # (Tq, Lk)
            s = s - jnp.max(s, axis=-1, keepdims=True)
            p = jnp.exp(s)
            # softmax denominator on the EUP (approximate reciprocal)
            p = p * pl.reciprocal(jnp.sum(p, axis=-1, keepdims=True), approx=True)
            oh = jnp.dot(p.astype(compute_dtype), v_p[:, sl],
                         preferred_element_type=jnp.float32)          # (Tq, Dh)
            # stack each head's output at a static lane offset ...
            head_slab[:, sl] = oh.astype(compute_dtype)
        # ... then ONE K=E output-projection matmul (full MXU rows)
        attn = jnp.dot(head_slab[...], wo_ref[...],
                       preferred_element_type=jnp.float32) + bo_ref[...]
        out = _residual_layernorm(resid_ref[0], attn, g_ref[...], beta_ref[...],
                                  eps)
        o_ref[0] = out.astype(o_ref.dtype)
    return kernel


def _attention_ln_block(resid, q_p, k_p, v_p, wo, bo, gamma, beta, num_heads,
                        *, eps, compute_dtype, max_q_tile=256):
    """out = LayerNorm(resid + softmax(q_p k_p^T) v_p @ Wo + bo).

    resid: (B, Lq, E) f32; q_p: (B, Lq, E); k_p/v_p: (B, Lk, E) (compute dtype,
    already projected — no per-q-tile projection recompute).
    Grid = (B, q-tiles); K/V index_map is t-invariant so they stay resident
    across all q-tiles of a batch.
    """
    # TODO(synk): for very large Lk add a kv-tile grid axis with online-softmax
    # scratch ("arbitrary" axis) so per-step VMEM stays bounded on v7x.
    B, Lq, E = resid.shape
    Lk = k_p.shape[1]
    head_dim = E // num_heads
    Tq = _pick_row_tile(Lq, max_q_tile)
    grid = (B, pl.cdiv(Lq, Tq))
    kernel = _make_attn_ln_kernel(num_heads, head_dim, eps, compute_dtype)

    q_spec = pl.BlockSpec((1, Tq, E), lambda bi, t: (bi, t, 0))
    kv_spec = pl.BlockSpec((1, Lk, E), lambda bi, t: (bi, 0, 0))
    vec_spec = pl.BlockSpec((1, E), lambda bi, t: (0, 0))

    return pl.pallas_call(
        kernel,
        out_shape=jax.ShapeDtypeStruct((B, Lq, E), jnp.float32),
        grid=grid,
        in_specs=[
            q_spec,                                           # resid (f32)
            q_spec,                                           # q_p
            kv_spec,                                          # k_p (resident)
            kv_spec,                                          # v_p (resident)
            pl.BlockSpec((E, E), lambda bi, t: (0, 0)),       # Wo
            vec_spec, vec_spec, vec_spec,                     # bo, gamma, beta
        ],
        out_specs=pl.BlockSpec((1, Tq, E), lambda bi, t: (bi, t, 0)),
        scratch_shapes=[pltpu.VMEM((Tq, E), compute_dtype)],  # head-output slab
        compiler_params=_compiler_params(("parallel", "parallel")),
    )(resid, q_p, k_p, v_p, wo, bo, gamma, beta)


# ----------------------------------------------------------------------------
# kernel 3: FFN + residual + LN
# ----------------------------------------------------------------------------
def _make_ffn_ln_kernel(eps, compute_dtype):
    def kernel(x_ref, w1_ref, b1_ref, w2_ref, b2_ref, g_ref, beta_ref, o_ref):
        x = x_ref[...]                                          # (Tr, E) f32
        h = jnp.dot(x.astype(compute_dtype), w1_ref[...],
                    preferred_element_type=jnp.float32) + b1_ref[...]
        h = jnp.maximum(h, 0.0)
        y = jnp.dot(h.astype(compute_dtype), w2_ref[...],
                    preferred_element_type=jnp.float32) + b2_ref[...]
        out = _residual_layernorm(x, y, g_ref[...], beta_ref[...], eps)
        o_ref[...] = out.astype(o_ref.dtype)
    return kernel


def ffn_block(x, w1_t, b1, w2_t, b2, gamma, beta, *, eps, compute_dtype,
              max_tile=512):
    """out = LayerNorm(x + relu(x @ W1 + b1) @ W2 + b2), row-tiled (cdiv grid)."""
    R, E = x.shape
    Dff = w1_t.shape[1]
    Tr = _pick_row_tile(R, max_tile)
    grid = (pl.cdiv(R, Tr),)
    vec_spec = pl.BlockSpec((1, E), lambda i: (0, 0))
    return pl.pallas_call(
        _make_ffn_ln_kernel(eps, compute_dtype),
        out_shape=jax.ShapeDtypeStruct((R, E), jnp.float32),
        grid=grid,
        in_specs=[
            pl.BlockSpec((Tr, E), lambda i: (i, 0)),
            pl.BlockSpec((E, Dff), lambda i: (0, 0)),
            pl.BlockSpec((1, Dff), lambda i: (0, 0)),
            pl.BlockSpec((Dff, E), lambda i: (0, 0)),
            vec_spec, vec_spec, vec_spec,
        ],
        out_specs=pl.BlockSpec((Tr, E), lambda i: (i, 0)),
        compiler_params=_compiler_params(("parallel",)),
    )(x, w1_t, b1, w2_t, b2, gamma, beta)


# ----------------------------------------------------------------------------
# parameter handling
# ----------------------------------------------------------------------------
def _xavier(key, shape):
    fan_out, fan_in = shape
    limit = (6.0 / (fan_in + fan_out)) ** 0.5
    return jax.random.uniform(key, shape, jnp.float32, -limit, limit)


def init_raw_params(key, d_model, dim_feedforward):
    """Parameters in the PyTorch layout (what a checkpoint would provide)."""
    ks = jax.random.split(key, 6)

    def mha(k0, k1):
        return (_xavier(k0, (3 * d_model, d_model)),            # in_proj_weight
                jnp.zeros((3 * d_model,), jnp.float32),          # in_proj_bias
                _xavier(k1, (d_model, d_model)),                 # out_proj.weight
                jnp.zeros((d_model,), jnp.float32))              # out_proj.bias

    ln = lambda: (jnp.ones((d_model,), jnp.float32),
                  jnp.zeros((d_model,), jnp.float32))
    return {
        "self_attn": mha(ks[0], ks[1]),
        "cross_attn": mha(ks[2], ks[3]),
        "ffn": (_xavier(ks[4], (dim_feedforward, d_model)),
                jnp.zeros((dim_feedforward,), jnp.float32),
                _xavier(ks[5], (d_model, dim_feedforward)),
                jnp.zeros((d_model,), jnp.float32)),
        "norm1": ln(), "norm2": ln(), "norm3": ln(),
    }


def prepare_params(raw, d_model, nhead, compute_dtype=jnp.bfloat16):
    """One-time weight prep (outside the forward): transpose to x@W layout,
    fold the 1/sqrt(head_dim) query scaling into Wq/bq, and cast MXU weights
    to compute_dtype.  Biases / LN params stay f32 (added to f32 accumulators)."""
    E = d_model
    scale = float(E // nhead) ** -0.5

    def prep_mha(p):
        in_w, in_b, out_w, out_b = p
        w_t = in_w.T.astype(jnp.float32)                         # (E, 3E)
        b = in_b.reshape(1, 3 * E).astype(jnp.float32)
        scale_vec = jnp.concatenate([jnp.full((E,), scale, jnp.float32),
                                     jnp.ones((2 * E,), jnp.float32)])
        w_t = w_t * scale_vec[None, :]
        b = b * scale_vec[None, :]
        return {
            "w_qkv": w_t.astype(compute_dtype), "b_qkv": b,
            "w_q": w_t[:, :E].astype(compute_dtype), "b_q": b[:, :E],
            "w_kv": w_t[:, E:].astype(compute_dtype), "b_kv": b[:, E:],
            "w_k": w_t[:, E:2 * E].astype(compute_dtype), "b_k": b[:, E:2 * E],
            "w_v": w_t[:, 2 * E:].astype(compute_dtype), "b_v": b[:, 2 * E:],
            "w_o": out_w.T.astype(compute_dtype),
            "b_o": out_b.reshape(1, E).astype(jnp.float32),
        }

    w1, b1, w2, b2 = raw["ffn"]
    ln = lambda gb: (gb[0].reshape(1, E).astype(jnp.float32),
                     gb[1].reshape(1, E).astype(jnp.float32))
    return {
        "self_attn": prep_mha(raw["self_attn"]),
        "cross_attn": prep_mha(raw["cross_attn"]),
        "ffn": {"w1": w1.T.astype(compute_dtype),
                "b1": b1.reshape(1, -1).astype(jnp.float32),
                "w2": w2.T.astype(compute_dtype),
                "b2": b2.reshape(1, -1).astype(jnp.float32)},
        "norm1": ln(raw["norm1"]), "norm2": ln(raw["norm2"]),
        "norm3": ln(raw["norm3"]),
        "nhead": nhead,
        "compute_dtype": compute_dtype,
    }


# ----------------------------------------------------------------------------
# forward pass (eval mode: dropout == identity)
# ----------------------------------------------------------------------------
def ec_transformer_decoder_layer_bf(q, qpe, k, kpe, prepared, value=None,
                                    value_pos=None, cross_only=False, *,
                                    eps=_LN_EPS):
    """Batch-first entry point: q/qpe (B, Lq, E), k/kpe (B, Lk, E) float32.
    When stacking layers, transpose key/key_pos (and value/value_pos) ONCE and
    call this directly — only the q path changes per layer."""
    # TODO(synk): attn_mask / key_padding_mask (None in the reference forward)
    #             are not implemented.
    nhead = prepared["nhead"]
    cdt = prepared["compute_dtype"]
    B, Lq, E = q.shape

    if not cross_only:
        sa = prepared["self_attn"]
        q_p, k_p, v_p = _proj_block(q, qpe, sa["w_qkv"], sa["b_qkv"],
                                    n_out=3, compute_dtype=cdt)
        q = _attention_ln_block(q, q_p, k_p, v_p, sa["w_o"], sa["b_o"],
                                *prepared["norm1"], nhead,
                                eps=eps, compute_dtype=cdt)

    ca = prepared["cross_attn"]
    (q_p,) = _proj_block(q, qpe, ca["w_q"], ca["b_q"], n_out=1,
                         compute_dtype=cdt)
    if value is None:
        # torch kv_same path: value = key (and value_pos = key_pos) in the module
        k_p, v_p = _proj_block(k, kpe, ca["w_kv"], ca["b_kv"], n_out=2,
                               compute_dtype=cdt)
    else:
        (k_p,) = _proj_block(k, kpe, ca["w_k"], ca["b_k"], n_out=1,
                             compute_dtype=cdt)
        (v_p,) = _proj_block(value, value_pos, ca["w_v"], ca["b_v"], n_out=1,
                             compute_dtype=cdt)
    q = _attention_ln_block(q, q_p, k_p, v_p, ca["w_o"], ca["b_o"],
                            *prepared["norm2"], nhead,
                            eps=eps, compute_dtype=cdt)

    f = prepared["ffn"]
    qf = ffn_block(q.reshape(B * Lq, E), f["w1"], f["b1"], f["w2"], f["b2"],
                   *prepared["norm3"], eps=eps, compute_dtype=cdt)
    return qf.reshape(B, Lq, E)


def ec_transformer_decoder_layer(query, key, query_pos, key_pos, prepared,
                                 value=None, value_pos=None, cross_only=False):
    """Inputs/outputs are (batch, d_model, length), like the PyTorch module."""
    q = jnp.transpose(query, (0, 2, 1))          # (B, Lq, E)
    k = jnp.transpose(key, (0, 2, 1))            # (B, Lk, E)
    qpe = jnp.transpose(query_pos, (0, 2, 1))
    kpe = jnp.transpose(key_pos, (0, 2, 1))
    v = vpe = None
    if value is not None:
        assert value_pos is not None
        v = jnp.transpose(value, (0, 2, 1))
        vpe = jnp.transpose(value_pos, (0, 2, 1))
    out = ec_transformer_decoder_layer_bf(q, qpe, k, kpe, prepared,
                                          value=v, value_pos=vpe,
                                          cross_only=cross_only)
    # Final transpose stays in XLA: folding it into the FFN out_spec would make
    # the output lane dim Lq (< 128 typically) -> masked partial stores.
    return jnp.transpose(out, (0, 2, 1))         # (B, d_model, Lq)


# ----------------------------------------------------------------------------
# pure-JAX reference (exact PyTorch math) for correctness checks
# ----------------------------------------------------------------------------
def _ref_mha(q_in, k_in, v_in, p, num_heads):
    in_w, in_b, out_w, out_b = p
    B, Lq, E = q_in.shape
    Dh = E // num_heads
    q = q_in @ in_w[:E, :].T + in_b[:E]
    k = k_in @ in_w[E:2 * E, :].T + in_b[E:2 * E]
    v = v_in @ in_w[2 * E:, :].T + in_b[2 * E:]
    q = q * (float(Dh) ** -0.5)

    def split(x):
        return x.reshape(B, x.shape[1], num_heads, Dh).transpose(0, 2, 1, 3)

    qh, kh, vh = split(q), split(k), split(v)
    s = jnp.einsum("bhqd,bhkd->bhqk", qh, kh)
    a = jax.nn.softmax(s, axis=-1)
    o = jnp.einsum("bhqk,bhkd->bhqd", a, vh)
    o = o.transpose(0, 2, 1, 3).reshape(B, Lq, E)
    return o @ out_w.T + out_b


def _ref_ln(x, g, b, eps=_LN_EPS):
    m = jnp.mean(x, axis=-1, keepdims=True)
    v = jnp.mean((x - m) ** 2, axis=-1, keepdims=True)
    return (x - m) * lax.rsqrt(v + eps) * g + b


def _ref_layer(query, key, qpos, kpos, raw, nhead, value=None, vpos=None,
               cross_only=False):
    q = jnp.transpose(query, (0, 2, 1))
    k = jnp.transpose(key, (0, 2, 1))
    qpe = jnp.transpose(qpos, (0, 2, 1))
    kpe = jnp.transpose(kpos, (0, 2, 1))
    if value is None:
        v, vpe = k, kpe
    else:
        v = jnp.transpose(value, (0, 2, 1))
        vpe = jnp.transpose(vpos, (0, 2, 1))
    if not cross_only:
        x = q + qpe
        q = _ref_ln(q + _ref_mha(x, x, x, raw["self_attn"], nhead),
                    *raw["norm1"])
    ca = _ref_mha(q + qpe, k + kpe, v + vpe, raw["cross_attn"], nhead)
    q = _ref_ln(q + ca, *raw["norm2"])
    w1, b1, w2, b2 = raw["ffn"]
    ff = jnp.maximum(q @ w1.T + b1, 0.0) @ w2.T + b2
    q = _ref_ln(q + ff, *raw["norm3"])
    return jnp.transpose(q, (0, 2, 1))


# ----------------------------------------------------------------------------
if __name__ == "__main__":
    B, d_model, nhead, dff = 2, 32, 4, 64
    Lq, Lk = 8, 16

    root = jax.random.PRNGKey(0)
    kq, kk, kqp, kkp, kval, kparam = jax.random.split(root, 6)

    query = jax.random.normal(kq, (B, d_model, Lq), jnp.float32)
    key = jax.random.normal(kk, (B, d_model, Lk), jnp.float32)
    query_pos = jax.random.normal(kqp, (B, d_model, Lq), jnp.float32)
    key_pos = jax.random.normal(kkp, (B, d_model, Lk), jnp.float32)
    value = jax.random.normal(kval, (B, d_model, Lk), jnp.float32)

    raw = init_raw_params(kparam, d_model, dff)
    ref = _ref_layer(query, key, query_pos, key_pos, raw, nhead)

    # f32 MXU path: tight check (approx EUP reciprocal in the softmax -> 5e-3)
    prep32 = prepare_params(raw, d_model, nhead, compute_dtype=jnp.float32)
    out32 = jax.block_until_ready(
        ec_transformer_decoder_layer(query, key, query_pos, key_pos, prep32))
    assert out32.shape == (B, d_model, Lq), out32.shape
    err32 = float(jnp.max(jnp.abs(out32 - ref)))
    assert err32 < 5e-3, f"f32 path error too large: {err32}"

    # separate-value path, f32
    ref_v = _ref_layer(query, key, query_pos, key_pos, raw, nhead,
                       value=value, vpos=key_pos)
    out_v = jax.block_until_ready(
        ec_transformer_decoder_layer(query, key, query_pos, key_pos, prep32,
                                     value=value, value_pos=key_pos))
    err_v = float(jnp.max(jnp.abs(out_v - ref_v)))
    assert err_v < 5e-3, f"separate-value path error too large: {err_v}"

    # default bf16 MXU path (f32 accumulation, f32 softmax / LN statistics)
    prep16 = prepare_params(raw, d_model, nhead)  # bfloat16 default
    out16 = jax.block_until_ready(
        ec_transformer_decoder_layer(query, key, query_pos, key_pos, prep16))
    err16 = float(jnp.max(jnp.abs(out16 - ref)))
    assert err16 < 0.25, f"bf16 path error too large: {err16}"

    print("KERNEL_OK")
</pallas_src>

<mosaic_0001>
module attributes {stable_mosaic.version = 11 : i64} {
  func.func @kernel(%arg0: i32, %arg1: i32, %arg2: memref<1x8x32xf32, #tpu.memory_space<vmem>>, %arg3: memref<1x8x32xf32, #tpu.memory_space<vmem>>, %arg4: memref<32x96xf32, #tpu.memory_space<vmem>>, %arg5: memref<1x96xf32, #tpu.memory_space<vmem>>, %arg6: memref<1x8x32xf32, #tpu.memory_space<vmem>>, %arg7: memref<1x8x32xf32, #tpu.memory_space<vmem>>, %arg8: memref<1x8x32xf32, #tpu.memory_space<vmem>>) attributes {dimension_semantics = [#tpu.dimension_semantics<parallel>, #tpu.dimension_semantics<parallel>], iteration_bounds = array<i64: 2, 1>, scalar_prefetch = 0 : i64, scratch_operands = 0 : i64, tpu.core_type = #tpu.core_type<tc>, window_params = [{transform_indices = @transform_0, window_bounds = array<i64: 1, 8, 32>}, {transform_indices = @transform_1, window_bounds = array<i64: 1, 8, 32>}, {pipeline_mode = #tpu.pipeline_mode<synchronous>, transform_indices = @transform_2, window_bounds = array<i64: 32, 96>}, {pipeline_mode = #tpu.pipeline_mode<synchronous>, transform_indices = @transform_3, window_bounds = array<i64: 1, 96>}, {transform_indices = @transform_4, window_bounds = array<i64: 1, 8, 32>}, {transform_indices = @transform_5, window_bounds = array<i64: 1, 8, 32>}, {transform_indices = @transform_6, window_bounds = array<i64: 1, 8, 32>}]} {
    %c0 = arith.constant 0 : index
    %c0_0 = arith.constant 0 : index
    %c0_1 = arith.constant 0 : index
    %0 = vector.load %arg2[%c0, %c0_0, %c0_1] : memref<1x8x32xf32, #tpu.memory_space<vmem>>, vector<1x8x32xf32>
    %1 = vector.shape_cast %0 : vector<1x8x32xf32> to vector<8x32xf32>
    %c0_2 = arith.constant 0 : index
    %c0_3 = arith.constant 0 : index
    %c0_4 = arith.constant 0 : index
    %2 = vector.load %arg3[%c0_2, %c0_3, %c0_4] : memref<1x8x32xf32, #tpu.memory_space<vmem>>, vector<1x8x32xf32>
    %3 = vector.shape_cast %2 : vector<1x8x32xf32> to vector<8x32xf32>
    %4 = arith.addf %1, %3 : vector<8x32xf32>
    %c0_5 = arith.constant 0 : index
    %c0_6 = arith.constant 0 : index
    %5 = vector.load %arg4[%c0_5, %c0_6] : memref<32x96xf32, #tpu.memory_space<vmem>>, vector<32x96xf32>
    %cst = arith.constant dense<0.000000e+00> : vector<8x96xf32>
    %6 = tpu.matmul %4, %5, %cst {dimension_numbers = #tpu.dot_dimension_numbers<[1], [0], [0], [1], [0, 0, 1, 1], [], []>} : vector<8x32xf32>, vector<32x96xf32>, vector<8x96xf32> -> vector<8x96xf32>
    %c0_7 = arith.constant 0 : index
    %c0_8 = arith.constant 0 : index
    %7 = vector.load %arg5[%c0_7, %c0_8] : memref<1x96xf32, #tpu.memory_space<vmem>>, vector<1x96xf32>
    %8 = vector.broadcast %7 : vector<1x96xf32> to vector<8x96xf32>
    %9 = arith.addf %6, %8 : vector<8x96xf32>
    %10 = vector.extract_strided_slice %9 {offsets = [0, 0], sizes = [8, 32], strides = [1, 1]} : vector<8x96xf32> to vector<8x32xf32>
    %c0_9 = arith.constant 0 : index
    %c0_10 = arith.constant 0 : index
    %c0_11 = arith.constant 0 : index
    %11 = vector.load %arg6[%c0_9, %c0_10, %c0_11] : memref<1x8x32xf32, #tpu.memory_space<vmem>>, vector<1x8x32xf32>
    %12 = vector.shape_cast %11 : vector<1x8x32xf32> to vector<8x32xf32>
    %13 = vector.shape_cast %10 : vector<8x32xf32> to vector<1x8x32xf32>
    tpu.vector_store %arg6[%c0_9, %c0_10, %c0_11], %13 {strides = array<i32>} : memref<1x8x32xf32, #tpu.memory_space<vmem>>, vector<1x8x32xf32>,
    %14 = vector.extract_strided_slice %9 {offsets = [0, 32], sizes = [8, 32], strides = [1, 1]} : vector<8x96xf32> to vector<8x32xf32>
    %c0_12 = arith.constant 0 : index
    %c0_13 = arith.constant 0 : index
    %c0_14 = arith.constant 0 : index
    %15 = vector.load %arg7[%c0_12, %c0_13, %c0_14] : memref<1x8x32xf32, #tpu.memory_space<vmem>>, vector<1x8x32xf32>
    %16 = vector.shape_cast %15 : vector<1x8x32xf32> to vector<8x32xf32>
    %17 = vector.shape_cast %14 : vector<8x32xf32> to vector<1x8x32xf32>
    tpu.vector_store %arg7[%c0_12, %c0_13, %c0_14], %17 {strides = array<i32>} : memref<1x8x32xf32, #tpu.memory_space<vmem>>, vector<1x8x32xf32>,
    %18 = vector.extract_strided_slice %9 {offsets = [0, 64], sizes = [8, 32], strides = [1, 1]} : vector<8x96xf32> to vector<8x32xf32>
    %c0_15 = arith.constant 0 : index
    %c0_16 = arith.constant 0 : index
    %c0_17 = arith.constant 0 : index
    %19 = vector.load %arg8[%c0_15, %c0_16, %c0_17] : memref<1x8x32xf32, #tpu.memory_space<vmem>>, vector<1x8x32xf32>
    %20 = vector.shape_cast %19 : vector<1x8x32xf32> to vector<8x32xf32>
    %21 = vector.shape_cast %18 : vector<8x32xf32> to vector<1x8x32xf32>
    tpu.vector_store %arg8[%c0_15, %c0_16, %c0_17], %21 {strides = array<i32>} : memref<1x8x32xf32, #tpu.memory_space<vmem>>, vector<1x8x32xf32>,
    return
  }
  func.func @transform_0(%arg0: i32, %arg1: i32) -> (i32, i32, i32) {
    %c0_i32 = arith.constant 0 : i32
    %c0_i32_0 = arith.constant 0 : i32
    return %arg0, %arg1, %c0_i32 : i32, i32, i32
  }
  func.func @transform_1(%arg0: i32, %arg1: i32) -> (i32, i32, i32) {
    %c0_i32 = arith.constant 0 : i32
    %c0_i32_0 = arith.constant 0 : i32
    return %arg0, %arg1, %c0_i32 : i32, i32, i32
  }
  func.func @transform_2(%arg0: i32, %arg1: i32) -> (i32, i32) {
    %c0_i32 = arith.constant 0 : i32
    %c0_i32_0 = arith.constant 0 : i32
    %c0_i32_1 = arith.constant 0 : i32
    return %c0_i32, %c0_i32_0 : i32, i32
  }
  func.func @transform_3(%arg0: i32, %arg1: i32) -> (i32, i32) {
    %c0_i32 = arith.constant 0 : i32
    %c0_i32_0 = arith.constant 0 : i32
    %c0_i32_1 = arith.constant 0 : i32
    return %c0_i32, %c0_i32_0 : i32, i32
  }
  func.func @transform_4(%arg0: i32, %arg1: i32) -> (i32, i32, i32) {
    %c0_i32 = arith.constant 0 : i32
    %c0_i32_0 = arith.constant 0 : i32
    return %arg0, %arg1, %c0_i32 : i32, i32, i32
  }
  func.func @transform_5(%arg0: i32, %arg1: i32) -> (i32, i32, i32) {
    %c0_i32 = arith.constant 0 : i32
    %c0_i32_0 = arith.constant 0 : i32
    return %arg0, %arg1, %c0_i32 : i32, i32, i32
  }
  func.func @transform_6(%arg0: i32, %arg1: i32) -> (i32, i32, i32) {
    %c0_i32 = arith.constant 0 : i32
    %c0_i32_0 = arith.constant 0 : i32
    return %arg0, %arg1, %c0_i32 : i32, i32, i32
  }
}

</mosaic_0001>

<llo_original>
// kernel: tpu_custom_call.1
$region0: #{tpu_custom_call.1}
  #allocation0 [shape = 'u32[]', space=smem, size = 0x4, offset = 0x4, fixed_abs, tag = 'smem constant byte address 0x4 - core index']
  #allocation1 [shape = 'u32[144,128]{1,0:T(1,128)}', space=vmem, size = 0x12000, scoped, tag = 'internal scratch']
  %s0 = inlined_call_operand.hbm [shape: f32[2,8,32], index: 0, kind: input, shape index: {}]
  %s1 = inlined_call_operand.hbm [shape: f32[2,8,32], index: 1, kind: input, shape index: {}]
  %s2 = inlined_call_operand.hbm [shape: f32[32,96], index: 2, kind: input, shape index: {}]
  %s3 = inlined_call_operand.vmem [shape: f32[1,96], index: 3, kind: input, shape index: {}]
  %s4 = inlined_call_operand.hbm [shape: f32[2,8,32], index: 4, kind: output, shape index: {0}]
  %s5 = inlined_call_operand.hbm [shape: f32[2,8,32], index: 5, kind: output, shape index: {1}]
  %s6 = inlined_call_operand.hbm [shape: f32[2,8,32], index: 6, kind: output, shape index: {2}]
  %7 = xla_tuple %s4, %s5, %s6
  %s8 = sld [smem:[#allocation0]]
  $region77: #{tpu_custom_call.1} parent=0
    _
  %s10 = ssub.s32 1, %s8
  %s11 = scalar_select 0, %s10, %s8
  $region1: #{tpu_custom_call.1} parent=0
    #allocation2 [shape = 'u8[8192]{0}', space=vmem, size = 0x2000, scoped, tag = 'input window, operand 0']
    #allocation3 [shape = 's32[2]{0}', space=sflag, size = 0x8, scoped, tag = 'scoped memory for tpu_custom_call.1']
    #allocation4 [shape = 's32[2]{0}', space=sflag, size = 0x8, scoped, tag = 'scoped memory for tpu_custom_call.1']
    #allocation5 [shape = 'u8[8192]{0}', space=vmem, size = 0x2000, scoped, tag = 'input window, operand 1']
    #allocation6 [shape = 's32[2]{0}', space=sflag, size = 0x8, scoped, tag = 'scoped memory for tpu_custom_call.1']
    #allocation7 [shape = 'u8[16384]{0}', space=vmem, size = 0x4000, scoped, tag = 'input window, operand 2, single buffered']
    #allocation8 [shape = 'u8[8192]{0}', space=vmem, size = 0x2000, scoped, tag = 'output window, operand 0']
    #allocation9 [shape = 'u8[8192]{0}', space=vmem, size = 0x2000, scoped, tag = 'output window, operand 1']
    #allocation10 [shape = 's32[2]{0}', space=sflag, size = 0x8, scoped, tag = 'scoped memory for tpu_custom_call.1']
    #allocation11 [shape = 'u8[8192]{0}', space=vmem, size = 0x2000, scoped, tag = 'output window, operand 2']
    %12 = vsyncpa [#allocation3], 0
    %s13 = scalar_lea.sflag [#allocation3], 1
    %14 = vsyncpa %s13, 0
    %15 = vsyncpa [#allocation6], 0
    %s16 = scalar_lea.sflag [#allocation6], 1
    %17 = vsyncpa %s16, 0
    %18 = vsyncpa [#allocation4], 0
    %s19 = scalar_lea.sflag [#allocation4], 1
    %20 = vsyncpa %s19, 0
    %21 = vsyncpa [#allocation10], 0
    %s22 = scalar_lea.sflag [#allocation10], 1
    %23 = vsyncpa %s22, 0
    loop: start=0, step=1, limit=4
    $region2: #{tpu_custom_call.1} parent=1 // loop_pre_header
      _
    $region3: #{tpu_custom_call.1} parent=1 // loop_header
      %s25 = sphi 0, %s29
      %p26 = scmp.ge.s32.totalorder %s25, 4
      %s32 = sphi 0, %s44
      %s33 = sphi 0, %s40
      %s34 = sphi 0, %s32
      %s35 = sphi 0, %s33
      %s36 = sphi 0, %s34
      %s37 = sphi 0, %s35
      %s49 = sphi 0, %s51
      %s52 = sphi 0, %s49
      %s53 = sphi 0, %s52
      %s69 = sphi 0, %s53
      %s77 = sphi 0, %s79
      %s80 = sphi 0, %s77
      %s81 = sphi 0, %s80
      %s97 = sphi 0, %s81
      %s101 = sphi 0, %s101
      %s103 = sphi 0, %s101
      %s104 = sphi 0, %s103
      %s118 = sphi 0, %s104
      %s122 = sphi 0, %s122
      %s124 = sphi 0, %s122
      %s125 = sphi 0, %s124
      %s139 = sphi 0, %s125
      %s147 = sphi 0, %s149
      %s150 = sphi 0, %s147
      %s151 = sphi 0, %s150
      %s167 = sphi 0, %s151
      %s175 = sphi 0, %s177
      %s178 = sphi 0, %s175
      %s179 = sphi 0, %s178
      %s195 = sphi 0, %s179
      %s203 = sphi 0, %s205
      %s206 = sphi 0, %s203
      %s207 = sphi 0, %s206
      %s223 = sphi 0, %s207
    $region4: #{tpu_custom_call.1} parent=1 // loop_header_branch
      %28 = sbr.rel (%p26) target = $region8
    $region5: #{tpu_custom_call.1} parent=1 // loop_body
      %s30 = ssub.s32 %s25, 1
      %s31 = ssub.s32 %s25, 2
      %s38 = sadd.s32 1, %s33
      %p39 = scmp.ge.s32.totalorder %s38, 1
      %s40 = scalar_select %p39, 0, %s38
      %s41 = sadd.s32 1, %s32
      %s42 = scalar_select %p39, %s41, %s32
      %p43 = scmp.ge.s32.totalorder %s42, 2
      %s44 = scalar_select %p43, 0, %s42
      %s45 = ssub.s32 %s32, %s44
      %s46 = ssub.s32 %s33, %s40
      %s47 = sor.u32 %s45, %s46
      %p48 = scmp.eq.s32.totalorder %s47, 0
      %s50 = sadd.s32 %s49, 1
      %s51 = scalar_select %p48, %s49, %s50
      %p54 = pneg %p48
      %p55 = scmp.eq.s32.totalorder %s25, 1
      %p56 = por %p54, %p55
      %p57 = scmp.ne.s32.totalorder %s49, %s52
      %p58 = scmp.eq.s32.totalorder %s25, 0
      %p59 = por %p57, %p58
      %p60 = scmp.ne.s32.totalorder %s49, %s52
      %p61 = scmp.eq.s32.totalorder %s30, 1
      %p62 = por %p60, %p61
      %p63 = scmp.ne.s32.totalorder %s52, %s53
      %p64 = scmp.eq.s32.totalorder %s30, 0
      %p65 = por %p63, %p64
      %p66 = scmp.ne.s32.totalorder %s52, %s53
      %p67 = scmp.eq.s32.totalorder %s31, 1
      %p68 = por %p66, %p67
      %p70 = scmp.ne.s32.totalorder %s53, %s69
      %p71 = scmp.eq.s32.totalorder %s31, 0
      %p72 = por %p70, %p71
      %s73 = ssub.s32 %s32, %s44
      %s74 = ssub.s32 %s33, %s40
      %s75 = sor.u32 %s73, %s74
      %p76 = scmp.eq.s32.totalorder %s75, 0
      %s78 = sadd.s32 %s77, 1
      %s79 = scalar_select %p76, %s77, %s78
      %p82 = pneg %p76
      %p83 = scmp.eq.s32.totalorder %s25, 1
      %p84 = por %p82, %p83
      %p85 = scmp.ne.s32.totalorder %s77, %s80
      %p86 = scmp.eq.s32.totalorder %s25, 0
      %p87 = por %p85, %p86
      %p88 = scmp.ne.s32.totalorder %s77, %s80
      %p89 = scmp.eq.s32.totalorder %s30, 1
      %p90 = por %p88, %p89
      %p91 = scmp.ne.s32.totalorder %s80, %s81
      %p92 = scmp.eq.s32.totalorder %s30, 0
      %p93 = por %p91, %p92
      %p94 = scmp.ne.s32.totalorder %s80, %s81
      %p95 = scmp.eq.s32.totalorder %s31, 1
      %p96 = por %p94, %p95
      %p98 = scmp.ne.s32.totalorder %s81, %s97
      %p99 = scmp.eq.s32.totalorder %s31, 0
      %p100 = por %p98, %p99
      %s102 = sadd.s32 %s101, 1
      %p105 = scmp.eq.s32.totalorder %s25, 1
      %p106 = scmp.ne.s32.totalorder %s101, %s103
      %p107 = scmp.eq.s32.totalorder %s25, 0
      %p108 = por %p106, %p107
      %p109 = scmp.ne.s32.totalorder %s101, %s103
      %p110 = scmp.eq.s32.totalorder %s30, 1
      %p111 = por %p109, %p110
      %p112 = scmp.ne.s32.totalorder %s103, %s104
      %p113 = scmp.eq.s32.totalorder %s30, 0
      %p114 = por %p112, %p113
      %p115 = scmp.ne.s32.totalorder %s103, %s104
      %p116 = scmp.eq.s32.totalorder %s31, 1
      %p117 = por %p115, %p116
      %p119 = scmp.ne.s32.totalorder %s104, %s118
      %p120 = scmp.eq.s32.totalorder %s31, 0
      %p121 = por %p119, %p120
      %s123 = sadd.s32 %s122, 1
      %p126 = scmp.eq.s32.totalorder %s25, 1
      %p127 = scmp.ne.s32.totalorder %s122, %s124
      %p128 = scmp.eq.s32.totalorder %s25, 0
      %p129 = por %p127, %p128
      %p130 = scmp.ne.s32.totalorder %s122, %s124
      %p131 = scmp.eq.s32.totalorder %s30, 1
      %p132 = por %p130, %p131
      %p133 = scmp.ne.s32.totalorder %s124, %s125
      %p134 = scmp.eq.s32.totalorder %s30, 0
      %p135 = por %p133, %p134
      %p136 = scmp.ne.s32.totalorder %s124, %s125
      %p137 = scmp.eq.s32.totalorder %s31, 1
      %p138 = por %p136, %p137
      %p140 = scmp.ne.s32.totalorder %s125, %s139
      %p141 = scmp.eq.s32.totalorder %s31, 0
      %p142 = por %p140, %p141
      %s143 = ssub.s32 %s32, %s44
      %s144 = ssub.s32 %s33, %s40
      %s145 = sor.u32 %s143, %s144
      %p146 = scmp.eq.s32.totalorder %s145, 0
      %s148 = sadd.s32 %s147, 1
      %s149 = scalar_select %p146, %s147, %s148
      %p152 = pneg %p146
      %p153 = scmp.eq.s32.totalorder %s25, 1
      %p154 = por %p152, %p153
      %p155 = scmp.ne.s32.totalorder %s147, %s150
      %p156 = scmp.eq.s32.totalorder %s25, 0
      %p157 = por %p155, %p156
      %p158 = scmp.ne.s32.totalorder %s147, %s150
      %p159 = scmp.eq.s32.totalorder %s30, 1
      %p160 = por %p158, %p159
      %p161 = scmp.ne.s32.totalorder %s150, %s151
      %p162 = scmp.eq.s32.totalorder %s30, 0
      %p163 = por %p161, %p162
      %p164 = scmp.ne.s32.totalorder %s150, %s151
      %p165 = scmp.eq.s32.totalorder %s31, 1
      %p166 = por %p164, %p165
      %p168 = scmp.ne.s32.totalorder %s151, %s167
      %p169 = scmp.eq.s32.totalorder %s31, 0
      %p170 = por %p168, %p169
      %s171 = ssub.s32 %s32, %s44
      %s172 = ssub.s32 %s33, %s40
      %s173 = sor.u32 %s171, %s172
      %p174 = scmp.eq.s32.totalorder %s173, 0
      %s176 = sadd.s32 %s175, 1
      %s177 = scalar_select %p174, %s175, %s176
      %p180 = pneg %p174
      %p181 = scmp.eq.s32.totalorder %s25, 1
      %p182 = por %p180, %p181
      %p183 = scmp.ne.s32.totalorder %s175, %s178
      %p184 = scmp.eq.s32.totalorder %s25, 0
      %p185 = por %p183, %p184
      %p186 = scmp.ne.s32.totalorder %s175, %s178
      %p187 = scmp.eq.s32.totalorder %s30, 1
      %p188 = por %p186, %p187
      %p189 = scmp.ne.s32.totalorder %s178, %s179
      %p190 = scmp.eq.s32.totalorder %s30, 0
      %p191 = por %p189, %p190
      %p192 = scmp.ne.s32.totalorder %s178, %s179
      %p193 = scmp.eq.s32.totalorder %s31, 1
      %p194 = por %p192, %p193
      %p196 = scmp.ne.s32.totalorder %s179, %s195
      %p197 = scmp.eq.s32.totalorder %s31, 0
      %p198 = por %p196, %p197
      %s199 = ssub.s32 %s32, %s44
      %s200 = ssub.s32 %s33, %s40
      %s201 = sor.u32 %s199, %s200
      %p202 = scmp.eq.s32.totalorder %s201, 0
      %s204 = sadd.s32 %s203, 1
      %s205 = scalar_select %p202, %s203, %s204
      %p208 = pneg %p202
      %p209 = scmp.eq.s32.totalorder %s25, 1
      %p210 = por %p208, %p209
      %p211 = scmp.ne.s32.totalorder %s203, %s206
      %p212 = scmp.eq.s32.totalorder %s25, 0
      %p213 = por %p211, %p212
      %p214 = scmp.ne.s32.totalorder %s203, %s206
      %p215 = scmp.eq.s32.totalorder %s30, 1
      %p216 = por %p214, %p215
      %p217 = scmp.ne.s32.totalorder %s206, %s207
      %p218 = scmp.eq.s32.totalorder %s30, 0
      %p219 = por %p217, %p218
      %p220 = scmp.ne.s32.totalorder %s206, %s207
      %p221 = scmp.eq.s32.totalorder %s31, 1
      %p222 = por %p220, %p221
      %p224 = scmp.ne.s32.totalorder %s207, %s223
      %p225 = scmp.eq.s32.totalorder %s31, 0
      %p226 = por %p224, %p225
      %p227 = scmp.le.s32.totalorder 1, %s25
      %p228 = scmp.lt.s32.totalorder %s25, 3
      %p229 = pnand %p227, %p228
      %p230 = pneg %p229
      // Predicated region
      $region9: #{tpu_custom_call.1} parent=5 // pred_check
        _
      $region10: #{tpu_custom_call.1} parent=5 // pred_check_branch
        %232 = sbr.rel (%p229) target = $region12
      $region11: #{tpu_custom_call.1} parent=5 // pred_region
        %s233 = ssub.s32 %s25, 1
        // Predicated region
        $region13: #{tpu_custom_call.1} parent=11 // pred_check
          %p234 = pneg %p114
        $region14: #{tpu_custom_call.1} parent=11 // pred_check_branch
          %236 = sbr.rel (%p234) target = $region16
        $region15: #{tpu_custom_call.1} parent=11 // pred_region
          %s238 = ssub.s32 512, 512
          %239 = vsyncadd [#allocation6], %s238
          %s240 = sshll.u32 [#allocation7], 4
          %s241 = int_to_ptr.vmem [resolvable:$true] %s240
          %246 = dma.hbm_to_vmem [thread:$0]  %s2, 512, %s241, [#allocation6], 128, 128, 8
        $region16: #{tpu_custom_call.1} parent=11 // pred_fallthru
          _
        // Predicated region
        $region17: #{tpu_custom_call.1} parent=11 // pred_check
          %p247 = pneg %p135
        $region18: #{tpu_custom_call.1} parent=11 // pred_check_branch
          %249 = sbr.rel (%p247) target = $region20
        $region19: #{tpu_custom_call.1} parent=11 // pred_region
          _
        $region20: #{tpu_custom_call.1} parent=11 // pred_fallthru
          _
      $region12: #{tpu_custom_call.1} parent=5 // pred_fallthru
        _
      %p250 = scmp.lt.s32.totalorder %s25, 2
      // Predicated region
      $region21: #{tpu_custom_call.1} parent=5 // pred_check
        %p251 = pneg %p250
      $region22: #{tpu_custom_call.1} parent=5 // pred_check_branch
        %253 = sbr.rel (%p251) target = $region24
      $region23: #{tpu_custom_call.1} parent=5 // pred_region
        // Predicated region
        $region25: #{tpu_custom_call.1} parent=23 // pred_check
          %p254 = pneg %p59
        $region26: #{tpu_custom_call.1} parent=23 // pred_check_branch
          %256 = sbr.rel (%p254) target = $region28
        $region27: #{tpu_custom_call.1} parent=23 // pred_region
          %s257 = sand.u32 %s49, 1
          %s258 = scalar_lea.sflag [#allocation3], %s257
          %s259 = sand.u32 %s49, 1
          %s260 = smul.addr %s259, 8
          %s261 = scalar_lea.vmem [#allocation2], %s260
          %s263 = ssub.s32 128, 128
          %264 = vsyncadd %s258, %s263
          %s265 = sadd.s32 %s33, %s32
          %s266 = smul.addr %s265, 128
          %s267 = scalar_lea.hbm %s0, %s266
          %s269 = sshll.u32 %s261, 4
          %s270 = int_to_ptr.vmem [resolvable:$true] %s269
          %272 = dma.hbm_to_vmem [thread:$0]  %s267, 128, %s270, %s258
        $region28: #{tpu_custom_call.1} parent=23 // pred_fallthru
          _
        // Predicated region
        $region29: #{tpu_custom_call.1} parent=23 // pred_check
          %p273 = pneg %p87
        $region30: #{tpu_custom_call.1} parent=23 // pred_check_branch
          %275 = sbr.rel (%p273) target = $region32
        $region31: #{tpu_custom_call.1} parent=23 // pred_region
          %s276 = sand.u32 %s25, 1
          %s277 = scalar_lea.sflag [#allocation6], %s276
          %s278 = sand.u32 %s77, 1
          %s279 = smul.addr %s278, 8
          %s280 = scalar_lea.vmem [#allocation5], %s279
          %s282 = ssub.s32 128, 128
          %283 = vsyncadd %s277, %s282
          %s284 = sadd.s32 %s33, %s32
          %s285 = smul.addr %s284, 128
          %s286 = scalar_lea.hbm %s1, %s285
          %s288 = sshll.u32 %s280, 4
          %s289 = int_to_ptr.vmem [resolvable:$true] %s288
          %291 = dma.hbm_to_vmem [thread:$0]  %s286, 128, %s289, %s277
        $region32: #{tpu_custom_call.1} parent=23 // pred_fallthru
          _
      $region24: #{tpu_custom_call.1} parent=5 // pred_fallthru
        _
      %p292 = scmp.le.s32.totalorder 1, %s25
      %p293 = scmp.lt.s32.totalorder %s25, 3
      %p294 = pnand %p292, %p293
      %p295 = pneg %p294
      // Predicated region
      $region33: #{tpu_custom_call.1} parent=5 // pred_check
        _
      $region34: #{tpu_custom_call.1} parent=5 // pred_check_branch
        %297 = sbr.rel (%p294) target = $region36
      $region35: #{tpu_custom_call.1} parent=5 // pred_region
        %s298 = ssub.s32 %s25, 1
        %s299 = sand.u32 %s52, 1
        %s300 = scalar_lea.sflag [#allocation3], %s299
        %s301 = sand.u32 %s52, 1
        %s302 = smul.addr %s301, 8
        %s303 = scalar_lea.vmem [#allocation2], %s302
        // Predicated region
        $region37: #{tpu_custom_call.1} parent=35 // pred_check
          %p304 = pneg %p65
        $region38: #{tpu_custom_call.1} parent=35 // pred_check_branch
          %306 = sbr.rel (%p304) target = $region40
        $region39: #{tpu_custom_call.1} parent=35 // pred_region
          %307 = dma.done %s300, 128
        $region40: #{tpu_custom_call.1} parent=35 // pred_fallthru
          _
        %s308 = sand.u32 %s30, 1
        %s309 = scalar_lea.sflag [#allocation6], %s308
        %s310 = sand.u32 %s80, 1
        %s311 = smul.addr %s310, 8
        %s312 = scalar_lea.vmem [#allocation5], %s311
        // Predicated region
        $region41: #{tpu_custom_call.1} parent=35 // pred_check
          %p313 = pneg %p93
        $region42: #{tpu_custom_call.1} parent=35 // pred_check_branch
          %315 = sbr.rel (%p313) target = $region44
        $region43: #{tpu_custom_call.1} parent=35 // pred_region
          %316 = dma.done %s309, 128
        $region44: #{tpu_custom_call.1} parent=35 // pred_fallthru
          _
        // Predicated region
        $region45: #{tpu_custom_call.1} parent=35 // pred_check
          %p317 = pneg %p114
        $region46: #{tpu_custom_call.1} parent=35 // pred_check_branch
          %319 = sbr.rel (%p317) target = $region48
        $region47: #{tpu_custom_call.1} parent=35 // pred_region
          %320 = dma.done [#allocation6], 512
        $region48: #{tpu_custom_call.1} parent=35 // pred_fallthru
          _
        %s321 = sand.u32 %s52, 1
        %s322 = scalar_lea.sflag [#allocation3], %s321
        %s323 = sand.u32 %s52, 1
        %s324 = smul.addr %s323, 8
        %s325 = scalar_lea.vmem [#allocation2], %s324
        %p326 = pneg %p65
        %p327 = pneg %p62
        %s328 = sand.u32 %s30, 1
        %s329 = scalar_lea.sflag [#allocation6], %s328
        %s330 = sand.u32 %s80, 1
        %s331 = smul.addr %s330, 8
        %s332 = scalar_lea.vmem [#allocation5], %s331
        %p333 = pneg %p93
        %p334 = pneg %p90
        %p335 = pneg %p114
        %p336 = pneg %p111
        %p337 = pneg %p135
        %p338 = pneg %p132
        %p339 = pneg %p163
        %p340 = pneg %p160
        %s341 = sand.u32 %s150, 1
        %s342 = scalar_lea.sflag [#allocation4], %s341
        %s343 = sand.u32 %s150, 1
        %s344 = smul.addr %s343, 8
        %s345 = scalar_lea.vmem [#allocation8], %s344
        %p346 = pneg %p191
        %p347 = pneg %p188
        %s348 = sand.u32 %s30, 1
        %s349 = scalar_lea.sflag [#allocation10], %s348
        %s350 = sand.u32 %s178, 1
        %s351 = smul.addr %s350, 8
        %s352 = scalar_lea.vmem [#allocation9], %s351
        %p353 = pneg %p219
        %p354 = pneg %p216
        %s355 = sand.u32 %s30, 1
        %s356 = scalar_lea.sflag [#allocation10], %s355
        %s357 = sand.u32 %s206, 1
        %s358 = smul.addr %s357, 8
        %s359 = scalar_lea.vmem [#allocation11], %s358
        %v360 = vld [vmem:[%s303] sm:$0xff]
        %v361 = vld [vmem:[%s312] sm:$0xff]
        %v362 = vadd.f32 %v360, %v361
        %v363 = vld [vmem:[#allocation7] sm:$0xff]
        %v364 = vld [vmem:[#allocation7 + $0x8] sm:$0xff]
        %v365 = vld [vmem:[#allocation7 + $0x10] sm:$0xff]
        %v366 = vld [vmem:[#allocation7 + $0x18] sm:$0xff]
        %v367 = vld [vmem:[%s3] sm:$0x1]
        %v369 = vlaneseq
        %v370 = vshrl.u32 %v369, 7
        %v371 = vsub.s32 0, %v370
        %v372 = vrot.slane %v367, %v371
        %vm374 = vcmask 261120
        %v376 = vsel %vm374, %v362, 0
        %378 = vmatprep.subr.mxu0 0.0
        %379 = vmatpush1.msra.mxu0 %v363
        %380 = vmatprep.subr.mxu0 0.0
        %381 = vmatpush1.msra.mxu0 %v364
        %382 = vmatprep.subr.mxu0 0.0
        %383 = vmatpush1.msra.mxu0 %v365
        %384 = vmatprep.subr.mxu0 0.0
        %385 = vmatpush1.msra.mxu0 %v366
        %386 = vmatprep.subr.mxu0 0.0
        %387 = vmatpush1.msra.mxu0 0.0
        %388 = vmatprep.subr.mxu0 0.0
        %389 = vmatpush1.msra.mxu0 0.0
        %390 = vmatprep.subr.mxu0 0.0
        %391 = vmatpush1.msra.mxu0 0.0
        %392 = vmatprep.subr.mxu0 0.0
        %393 = vmatpush1.msra.mxu0 0.0
        %394 = vmatprep.subr.mxu0 0.0
        %395 = vmatpush1.msra.mxu0 0.0
        %396 = vmatprep.subr.mxu0 0.0
        %397 = vmatpush1.msra.mxu0 0.0
        %398 = vmatprep.subr.mxu0 0.0
        %399 = vmatpush1.msra.mxu0 0.0
        %400 = vmatprep.subr.mxu0 0.0
        %401 = vmatpush1.msra.mxu0 0.0
        %402 = vmatprep.subr.mxu0 0.0
        %403 = vmatpush1.msra.mxu0 0.0
        %404 = vmatprep.subr.mxu0 0.0
        %405 = vmatpush1.msra.mxu0 0.0
        %406 = vmatprep.subr.mxu0 0.0
        %407 = vmatpush1.msra.mxu0 0.0
        %408 = vmatprep.subr.mxu0 0.0
        %409 = vmatpush1.msra.mxu0 0.0
        %410 = vmatprep.subr.mxu0 0.0
        %411 = vmatpush1.msra.mxu0 0.0
        %412 = vmatprep.subr.mxu0 0.0
        %413 = vmatpush1.msra.mxu0 0.0
        %414 = vmatprep.subr.mxu0 0.0
        %415 = vmatpush1.msra.mxu0 0.0
        %416 = vmatprep.subr.mxu0 0.0
        %417 = vmatpush1.msra.mxu0 0.0
        %418 = vmatprep.subr.mxu0 0.0
        %419 = vmatpush1.msra.mxu0 0.0
        %420 = vmatprep.subr.mxu0 0.0
        %421 = vmatpush1.msra.mxu0 0.0
        %422 = vmatprep.subr.mxu0 0.0
        %423 = vmatpush1.msra.mxu0 0.0
        %424 = vmatprep.subr.mxu0 0.0
        %425 = vmatpush1.msra.mxu0 0.0
        %426 = vmatprep.subr.mxu0 0.0
        %427 = vmatpush1.msra.mxu0 0.0
        %428 = vmatprep.subr.mxu0 0.0
        %429 = vmatpush1.msra.mxu0 0.0
        %430 = vmatprep.subr.mxu0 0.0
        %431 = vmatpush1.msra.mxu0 0.0
        %432 = vmatprep.subr.mxu0 0.0
        %433 = vmatpush1.msra.mxu0 0.0
        %434 = vmatprep.subr.mxu0 0.0
        %435 = vmatpush1.msra.mxu0 0.0
        %436 = vmatprep.subr.mxu0 0.0
        %437 = vmatpush1.msra.mxu0 0.0
        %438 = vmatprep.subr.mxu0 0.0
        %439 = vmatpush1.msra.mxu0 0.0
        %440 = vmatprep.subr.mxu0 0.0
        %441 = vmatpush1.msra.mxu0 0.0
        %442 = vmatprep.mubr.f32.mxu0 0.0
        %443 = vmatmul.mubr.f32.gmra.mrb[0].mxu0 %v376
        %v444 = vpop.f32.mrb[0].mxu0
        %v445 = vadd.f32 %v372, %v444
        %v446 = vpop.f32.mrb[0].mxu0
        %447 = vdwg.mxu0
        %448 = vst.msk [vmem:[%s345] sm:$0xff] %vm374, %v445
        %450 = vrot.lane.b32.xlu0 %v445, 96
        %v451 = vpop.permute.xlu0 %450
        %453 = vst.msk [vmem:[%s352] sm:$0xff] %vm374, %v451
        %454 = vrot.lane.b32.xlu0 %v445, 64
        %v455 = vpop.permute.xlu0 %454
        %457 = vst.msk [vmem:[%s359] sm:$0xff] %vm374, %v455
        %s458 = sand.u32 %s150, 1
        %s459 = scalar_lea.sflag [#allocation4], %s458
        %s460 = sand.u32 %s150, 1
        %s461 = smul.addr %s460, 8
        %s462 = scalar_lea.vmem [#allocation8], %s461
        %s463 = sand.u32 %s30, 1
        %s464 = scalar_lea.sflag [#allocation10], %s463
        %s465 = sand.u32 %s178, 1
        %s466 = smul.addr %s465, 8
        %s467 = scalar_lea.vmem [#allocation9], %s466
        %s468 = sand.u32 %s30, 1
        %s469 = scalar_lea.sflag [#allocation10], %s468
        %s470 = sand.u32 %s206, 1
        %s471 = smul.addr %s470, 8
        %s472 = scalar_lea.vmem [#allocation11], %s471
        // Predicated region
        $region49: #{tpu_custom_call.1} parent=35 // pred_check
          %p473 = pneg %p160
        $region50: #{tpu_custom_call.1} parent=35 // pred_check_branch
          %475 = sbr.rel (%p473) target = $region52
        $region51: #{tpu_custom_call.1} parent=35 // pred_region
          %s477 = ssub.s32 128, 128
          %478 = vsyncadd %s459, %s477
          %s479 = sadd.s32 %s35, %s34
          %s480 = smul.addr %s479, 128
          %s481 = scalar_lea.hbm %s4, %s480
          %s483 = sshll.u32 %s462, 4
          %s484 = int_to_ptr.vmem [resolvable:$true] %s483
          %486 = dma.vmem_to_hbm [thread:$0]  %s484, 128, %s481, %s459
        $region52: #{tpu_custom_call.1} parent=35 // pred_fallthru
          _
        // Predicated region
        $region53: #{tpu_custom_call.1} parent=35 // pred_check
          %p487 = pneg %p188
        $region54: #{tpu_custom_call.1} parent=35 // pred_check_branch
          %489 = sbr.rel (%p487) target = $region56
        $region55: #{tpu_custom_call.1} parent=35 // pred_region
          %s491 = ssub.s32 128, 128
          %492 = vsyncadd %s464, %s491
          %s493 = sadd.s32 %s35, %s34
          %s494 = smul.addr %s493, 128
          %s495 = scalar_lea.hbm %s5, %s494
          %s497 = sshll.u32 %s467, 4
          %s498 = int_to_ptr.vmem [resolvable:$true] %s497
          %500 = dma.vmem_to_hbm [thread:$0]  %s498, 128, %s495, %s464
        $region56: #{tpu_custom_call.1} parent=35 // pred_fallthru
          _
        // Predicated region
        $region57: #{tpu_custom_call.1} parent=35 // pred_check
          %p501 = pneg %p216
        $region58: #{tpu_custom_call.1} parent=35 // pred_check_branch
          %503 = sbr.rel (%p501) target = $region60
        $region59: #{tpu_custom_call.1} parent=35 // pred_region
          %s505 = ssub.s32 128, 128
          %506 = vsyncadd %s469, %s505
          %s507 = sadd.s32 %s35, %s34
          %s508 = smul.addr %s507, 128
          %s509 = scalar_lea.hbm %s6, %s508
          %s511 = sshll.u32 %s472, 4
          %s512 = int_to_ptr.vmem [resolvable:$true] %s511
          %514 = dma.vmem_to_hbm [thread:$0]  %s512, 128, %s509, %s469
        $region60: #{tpu_custom_call.1} parent=35 // pred_fallthru
          _
      $region36: #{tpu_custom_call.1} parent=5 // pred_fallthru
        _
      %p515 = scmp.le.s32.totalorder 2, %s25
      // Predicated region
      $region61: #{tpu_custom_call.1} parent=5 // pred_check
        %p516 = pneg %p515
      $region62: #{tpu_custom_call.1} parent=5 // pred_check_branch
        %518 = sbr.rel (%p516) target = $region64
      $region63: #{tpu_custom_call.1} parent=5 // pred_region
        %s519 = ssub.s32 %s25, 2
        // Predicated region
        $region65: #{tpu_custom_call.1} parent=63 // pred_check
          %p520 = pneg %p166
        $region66: #{tpu_custom_call.1} parent=63 // pred_check_branch
          %522 = sbr.rel (%p520) target = $region68
        $region67: #{tpu_custom_call.1} parent=63 // pred_region
          %s523 = sand.u32 %s151, 1
          %s524 = scalar_lea.sflag [#allocation4], %s523
          %s525 = sand.u32 %s151, 1
          %s526 = smul.addr %s525, 8
          %s527 = scalar_lea.vmem [#allocation8], %s526
          %528 = dma.done %s524, 128
        $region68: #{tpu_custom_call.1} parent=63 // pred_fallthru
          _
        // Predicated region
        $region69: #{tpu_custom_call.1} parent=63 // pred_check
          %p529 = pneg %p194
        $region70: #{tpu_custom_call.1} parent=63 // pred_check_branch
          %531 = sbr.rel (%p529) target = $region72
        $region71: #{tpu_custom_call.1} parent=63 // pred_region
          %s532 = sand.u32 %s31, 1
          %s533 = scalar_lea.sflag [#allocation10], %s532
          %s534 = sand.u32 %s179, 1
          %s535 = smul.addr %s534, 8
          %s536 = scalar_lea.vmem [#allocation9], %s535
          %537 = dma.done %s533, 128
        $region72: #{tpu_custom_call.1} parent=63 // pred_fallthru
          _
        // Predicated region
        $region73: #{tpu_custom_call.1} parent=63 // pred_check
          %p538 = pneg %p222
        $region74: #{tpu_custom_call.1} parent=63 // pred_check_branch
          %540 = sbr.rel (%p538) target = $region76
        $region75: #{tpu_custom_call.1} parent=63 // pred_region
          %s541 = sand.u32 %s31, 1
          %s542 = scalar_lea.sflag [#allocation10], %s541
          %s543 = sand.u32 %s207, 1
          %s544 = smul.addr %s543, 8
          %s545 = scalar_lea.vmem [#allocation11], %s544
          %546 = dma.done %s542, 128
        $region76: #{tpu_custom_call.1} parent=63 // pred_fallthru
          _
      $region64: #{tpu_custom_call.1} parent=5 // pred_fallthru
        _
    $region6: #{tpu_custom_call.1} parent=1 // loop_footer
      %s29 = sadd.s32 1, %s25
    $region7: #{tpu_custom_call.1} parent=1 // loop_footer_branch
      %24 = sbr.rel target = $region3
    $region8: #{tpu_custom_call.1} parent=1 // loop_exit
      _
    %547 = vsyncpa [#allocation3], 1
    %s548 = scalar_lea.sflag [#allocation3], 1
    %549 = vsyncpa %s548, 1
    %550 = vsyncpa [#allocation6], 1
    %s551 = scalar_lea.sflag [#allocation6], 1
    %552 = vsyncpa %s551, 1
    %553 = vsyncpa [#allocation4], 1
    %s554 = scalar_lea.sflag [#allocation4], 1
    %555 = vsyncpa %s554, 1
    %556 = vsyncpa [#allocation10], 1
    %s557 = scalar_lea.sflag [#allocation10], 1
    %558 = vsyncpa %s557, 1

</llo_original>
